<compile_context>
chip_gen: v6e
topology: v6e:2x2x1
jax: 0.10.0
libtpu: 0.0.40
codegen_flags: <defaults>
</compile_context>

<pallas_src>
import functools

import jax
import jax.numpy as jnp
from jax.experimental import pallas as pl
from jax.experimental.pallas import tpu as pltpu


# ----------------------------- Pallas kernel -------------------------------

def _relu_kernel(x_ref, o_ref):
    # Elementwise max(x, 0) on one (block_rows, width) VMEM tile (pure VPU).
    o_ref[...] = jnp.maximum(x_ref[...], jnp.zeros((), x_ref.dtype))


def _choose_width(n):
    """Widest lane-dense width (multiple of 128) that divides n, else None."""
    for w in (2048, 1024, 512, 256, 128):
        if n % w == 0:
            return w
    return None


def _choose_block_rows(rows, width, itemsize):
    """~2 MiB blocks, rows a multiple of 32; keep >=2 grid steps when possible."""
    target_bytes = 2 * 1024 * 1024
    br = max(32, (target_bytes // (width * itemsize)) // 32 * 32)
    # Keep at least 2 grid steps so v7x's two TensorCores both get work.
    half = (rows // 2) // 32 * 32
    if half >= 32:
        br = min(br, half)
    if br >= rows:
        # Single full-extent block (block dim == full array dim is allowed).
        return rows
    return br


def _pallas_relu_impl(x):
    orig_shape = x.shape
    dtype = x.dtype
    itemsize = jnp.dtype(dtype).itemsize
    n = x.size

    flat = x.reshape(-1)

    width = _choose_width(n)
    if width is None:
        # Rare case: total size not a multiple of 128 — pad only up to one row.
        # (Zero-pad is safe for ReLU; padded tail is sliced off below.)
        width = 512
        n_pad = pl.cdiv(n, width) * width
        flat = jnp.pad(flat, (0, n_pad - n))
    else:
        n_pad = n

    rows = n_pad // width
    x2d = flat.reshape(rows, width)

    block_rows = _choose_block_rows(rows, width, itemsize)
    grid = (pl.cdiv(rows, block_rows),)

    out2d = pl.pallas_call(
        _relu_kernel,
        out_shape=jax.ShapeDtypeStruct((rows, width), dtype),
        grid=grid,
        in_specs=[pl.BlockSpec((block_rows, width), lambda i: (i, 0))],
        out_specs=pl.BlockSpec((block_rows, width), lambda i: (i, 0)),
        compiler_params=pltpu.CompilerParams(
            dimension_semantics=("parallel",),
        ),
    )(x2d)

    out_flat = out2d.reshape(-1)
    if n_pad != n:
        out_flat = out_flat[:n]
    return out_flat.reshape(orig_shape)


_PALLAS_MIN_ELEMS = 1 << 15  # below ~32K elements, kernel dispatch is pure overhead


def pallas_relu(x, *, force_pallas=False):
    """Elementwise ReLU; Pallas kernel for large arrays, fused XLA op for tiny ones."""
    if (not force_pallas) and x.size < _PALLAS_MIN_ELEMS:
        return jnp.maximum(x, jnp.zeros((), x.dtype))
    return _pallas_relu_impl(x)


# --------------------- FunctionModule equivalent ---------------------------

class PallasFunctionModule:
    """JAX/Pallas equivalent of caffemodel2pytorch.FunctionModule:
    stores an arbitrary forward callable and applies it to the inputs."""

    def __init__(self, forward):
        self.forward_func = forward

    def __call__(self, *inputs):
        return self.forward_func(*inputs)


# --------------------------------- main -------------------------------------

if __name__ == "__main__":
    key = jax.random.PRNGKey(0)
    k1, k2 = jax.random.split(key)

    # Small NCHW input consistent with a conv-net feature map (uses the fast
    # small-tensor fallback inside the wrapped forward).
    x = jax.random.normal(k1, (2, 4, 16, 16), dtype=jnp.float32)
    module = PallasFunctionModule(pallas_relu)
    out_small = jax.block_until_ready(module(x))
    ref_small = jnp.maximum(x, 0.0)
    assert out_small.shape == x.shape and out_small.dtype == x.dtype
    assert jnp.allclose(out_small, ref_small), "small-input ReLU mismatch"

    # Force the Pallas path on the same small input (single full-extent block).
    module_forced = PallasFunctionModule(
        functools.partial(pallas_relu, force_pallas=True))
    out_forced = jax.block_until_ready(module_forced(x))
    assert jnp.allclose(out_forced, ref_small), "forced Pallas ReLU mismatch (small)"

    # Moderate input that exercises the multi-step tiled Pallas path
    # (wide lane-dense slab, >=2 grid steps).
    x_large = jax.random.normal(k2, (8, 16, 32, 32), dtype=jnp.float32)
    out_large = jax.block_until_ready(module(x_large))
    ref_large = jnp.maximum(x_large, 0.0)
    assert out_large.shape == x_large.shape and out_large.dtype == x_large.dtype
    assert jnp.allclose(out_large, ref_large), "Pallas ReLU mismatch vs reference"

    print("KERNEL_OK")
</pallas_src>

<mosaic_0001>
module attributes {stable_mosaic.version = 11 : i64} {
  func.func @_relu_kernel(%arg0: i32, %arg1: memref<1x2048xf32, #tpu.memory_space<vmem>>, %arg2: memref<1x2048xf32, #tpu.memory_space<vmem>>) attributes {dimension_semantics = [#tpu.dimension_semantics<parallel>], iteration_bounds = array<i64: 1>, scalar_prefetch = 0 : i64, scratch_operands = 0 : i64, tpu.core_type = #tpu.core_type<tc>, window_params = [{transform_indices = @transform_0, window_bounds = array<i64: 1, 2048>}, {transform_indices = @transform_1, window_bounds = array<i64: 1, 2048>}]} {
    %c0 = arith.constant 0 : index
    %c0_0 = arith.constant 0 : index
    %0 = vector.load %arg1[%c0, %c0_0] : memref<1x2048xf32, #tpu.memory_space<vmem>>, vector<1x2048xf32>
    %cst = arith.constant 0.000000e+00 : f32
    %1 = vector.broadcast %cst : f32 to vector<1x2048xf32>
    %2 = arith.maximumf %0, %1 : vector<1x2048xf32>
    %c0_1 = arith.constant 0 : index
    %c0_2 = arith.constant 0 : index
    %3 = vector.load %arg2[%c0_1, %c0_2] : memref<1x2048xf32, #tpu.memory_space<vmem>>, vector<1x2048xf32>
    tpu.vector_store %arg2[%c0_1, %c0_2], %2 {strides = array<i32>} : memref<1x2048xf32, #tpu.memory_space<vmem>>, vector<1x2048xf32>,
    return
  }
  func.func @transform_0(%arg0: i32) -> (i32, i32) {
    %c0_i32 = arith.constant 0 : i32
    %c0_i32_0 = arith.constant 0 : i32
    return %arg0, %c0_i32 : i32, i32
  }
  func.func @transform_1(%arg0: i32) -> (i32, i32) {
    %c0_i32 = arith.constant 0 : i32
    %c0_i32_0 = arith.constant 0 : i32
    return %arg0, %c0_i32 : i32, i32
  }
}

</mosaic_0001>

<llo_original>
// kernel: tpu_custom_call.1
$region0: #{tpu_custom_call.1}
  #allocation0 [shape = 'u32[]', space=smem, size = 0x4, offset = 0x4, fixed_abs, tag = 'smem constant byte address 0x4 - core index']
  #allocation1 [shape = 'u32[144,128]{1,0:T(1,128)}', space=vmem, size = 0x12000, scoped, tag = 'internal scratch']
  %s0 = inlined_call_operand.hbm [shape: f32[1,2048], index: 0, kind: input, shape index: {}]
  %s1 = inlined_call_operand.hbm [shape: f32[1,2048], index: 1, kind: output, shape index: {}]
  %s2 = sld [smem:[#allocation0]]
  $region18: #{tpu_custom_call.1} parent=0
    _
  %s4 = ssub.s32 1, %s2
  %s5 = scalar_select 0, %s4, %s2
  $region1: #{tpu_custom_call.1} parent=0
    #allocation2 [shape = 'u8[8192]{0}', space=vmem, size = 0x2000, scoped, tag = 'input window, operand 0, single buffered']
    #allocation3 [shape = 's32[1]{0}', space=sflag, size = 0x4, scoped, tag = 'scoped memory for tpu_custom_call.1']
    #allocation4 [shape = 's32[1]{0}', space=sflag, size = 0x4, scoped, tag = 'scoped memory for tpu_custom_call.1']
    #allocation5 [shape = 'u8[8192]{0}', space=vmem, size = 0x2000, scoped, tag = 'output window, operand 0, single buffered']
    %6 = vsyncpa [#allocation3], 0
    %7 = vsyncpa [#allocation4], 0
    // Predicated region
    $region2: #{tpu_custom_call.1} parent=1 // pred_check
      _
    $region3: #{tpu_custom_call.1} parent=1 // pred_check_branch
      %9 = sbr.rel (0) target = $region5
    $region4: #{tpu_custom_call.1} parent=1 // pred_region
      %s11 = ssub.s32 256, 256
      %12 = vsyncadd [#allocation3], %s11
      %s14 = sshll.u32 [#allocation2], 4
      %s15 = int_to_ptr.vmem [resolvable:$true] %s14
      %17 = dma.hbm_to_vmem [thread:$0]  %s0, 256, %s15, [#allocation3]
    $region5: #{tpu_custom_call.1} parent=1 // pred_fallthru
      _
    // Predicated region
    $region6: #{tpu_custom_call.1} parent=1 // pred_check
      _
    $region7: #{tpu_custom_call.1} parent=1 // pred_check_branch
      %19 = sbr.rel (0) target = $region9
    $region8: #{tpu_custom_call.1} parent=1 // pred_region
      %20 = dma.done [#allocation3], 256
    $region9: #{tpu_custom_call.1} parent=1 // pred_fallthru
      _
    %v21 = vld [vmem:[#allocation2] sm:$0xff]
    %v22 = vld [vmem:[#allocation2 + $0x8] sm:$0xff]
    %v23 = vmax.f32 %v21, 0.0
    %v24 = vmax.f32 %v22, 0.0
    %25 = vst [vmem:[#allocation5] sm:$0xff] %v23
    %26 = vst [vmem:[#allocation5 + $0x8] sm:$0xff] %v24
    // Predicated region
    $region10: #{tpu_custom_call.1} parent=1 // pred_check
      _
    $region11: #{tpu_custom_call.1} parent=1 // pred_check_branch
      %28 = sbr.rel (0) target = $region13
    $region12: #{tpu_custom_call.1} parent=1 // pred_region
      %s30 = ssub.s32 256, 256
      %31 = vsyncadd [#allocation4], %s30
      %s33 = sshll.u32 [#allocation5], 4
      %s34 = int_to_ptr.vmem [resolvable:$true] %s33
      %36 = dma.vmem_to_hbm [thread:$0]  %s34, 256, %s1, [#allocation4]
    $region13: #{tpu_custom_call.1} parent=1 // pred_fallthru
      _
    // Predicated region
    $region14: #{tpu_custom_call.1} parent=1 // pred_check
      _
    $region15: #{tpu_custom_call.1} parent=1 // pred_check_branch
      %38 = sbr.rel (0) target = $region17
    $region16: #{tpu_custom_call.1} parent=1 // pred_region
      %39 = dma.done [#allocation4], 256
    $region17: #{tpu_custom_call.1} parent=1 // pred_fallthru
      _
    %40 = vsyncpa [#allocation3], 1
    %41 = vsyncpa [#allocation4], 1

</llo_original>
